<compile_context>
chip_gen: v6e
topology: v6e:2x2x1
jax: 0.10.0
libtpu: 0.0.40
codegen_flags: <defaults>
</compile_context>

<pallas_src>
import functools

import jax
import jax.numpy as jnp
from jax.experimental import pallas as pl
from jax.experimental.pallas import tpu as pltpu

WIDTH_CLASSES = [1, 2, 4, 8, 16, 32, 64, 128, 256]
NUM_CLASSES = len(WIDTH_CLASSES)  # 9


def _mlp_kernel(x_ref, w1_ref, b1_ref, w2_ref, b2_ref, o_ref, *, mxu_dtype):
    """One batch tile: logits = ReLU(x @ W1 + b1) @ W2 + b2, f32 accumulate."""
    x = x_ref[...]                       # (block_m, in_ch)
    w1 = w1_ref[...]                     # (in_ch, hidden)
    w2 = w2_ref[...]                     # (hidden, NUM_CLASSES)
    if mxu_dtype is not None:            # in-kernel cast: no extra HBM traffic
        x = x.astype(mxu_dtype)
        w1 = w1.astype(mxu_dtype)
        w2 = w2.astype(mxu_dtype)

    h = jnp.dot(x, w1, preferred_element_type=jnp.float32) + b1_ref[...]
    h = jnp.maximum(h, 0.0)              # (block_m, hidden)
    if mxu_dtype is not None:
        h = h.astype(mxu_dtype)

    logits = jnp.dot(h, w2, preferred_element_type=jnp.float32) + b2_ref[...]
    o_ref[...] = logits.astype(o_ref.dtype)   # (block_m, NUM_CLASSES)


@functools.partial(jax.jit, static_argnames=("block_m", "mxu_dtype"))
def node_width_predictor(x, w1, b1, w2, b2, *, block_m=None, mxu_dtype=None):
    """Forward pass of NodeWidthPredictor.

    x : (N, in_channels) float32
    w1: (in_channels, hidden_dim), b1: (hidden_dim,)
    w2: (hidden_dim, NUM_CLASSES), b2: (NUM_CLASSES,)
    returns width_logits: (N, NUM_CLASSES) float32
    """
    n, in_ch = x.shape
    hidden = w1.shape[1]

    if block_m is None:
        # Big tile to amortize the per-grid-step overhead (step-overhead-bound
        # regime), capped at 8192 rows and at ~ceil(N/2) (rounded to 128) so
        # grid_m >= 2 whenever N > 128 and both v7x TensorCores stay busy.
        half = (((n + 1) // 2) + 127) // 128 * 128
        block_m = max(128, min(8192, half))
    assert block_m % 128 == 0, "block_m must be a multiple of 128"

    grid_m = pl.cdiv(n, block_m)  # ragged tail handled by partial last block

    # Tiny (few-hundred-byte) bias reshapes; weights are passed through as-is.
    b1r = b1.reshape(1, hidden).astype(jnp.float32)
    b2r = b2.reshape(1, NUM_CLASSES).astype(jnp.float32)

    flops = 2 * n * (in_ch * hidden + hidden * NUM_CLASSES)
    bytes_accessed = (n * in_ch * x.dtype.itemsize          # x read
                      + n * NUM_CLASSES * 4                 # logits write
                      + (in_ch * hidden + hidden * NUM_CLASSES) * 4
                      + (hidden + NUM_CLASSES) * 4)         # weights / biases

    out = pl.pallas_call(
        functools.partial(_mlp_kernel, mxu_dtype=mxu_dtype),
        out_shape=jax.ShapeDtypeStruct((n, NUM_CLASSES), jnp.float32),
        grid_spec=pltpu.PrefetchScalarGridSpec(
            num_scalar_prefetch=0,
            grid=(grid_m,),
            in_specs=[
                pl.BlockSpec((block_m, in_ch), lambda i: (i, 0)),       # x
                pl.BlockSpec((in_ch, hidden), lambda i: (0, 0)),        # W1
                pl.BlockSpec((1, hidden), lambda i: (0, 0)),            # b1
                pl.BlockSpec((hidden, NUM_CLASSES), lambda i: (0, 0)),  # W2
                pl.BlockSpec((1, NUM_CLASSES), lambda i: (0, 0)),       # b2
            ],
            out_specs=pl.BlockSpec((block_m, NUM_CLASSES), lambda i: (i, 0)),
        ),
        compiler_params=pltpu.CompilerParams(
            dimension_semantics=("parallel",)),
        cost_estimate=pl.CostEstimate(flops=flops, transcendentals=0,
                                      bytes_accessed=bytes_accessed),
    )(x, w1, b1r, w2, b2r)

    return out  # (N, NUM_CLASSES) -- no wrapper-side slice/transpose needed


def init_params(key, in_channels, hidden_dim):
    """Deterministic init mimicking nn.Linear default (uniform +-1/sqrt(fan_in))."""
    k1, k2, k3, k4 = jax.random.split(key, 4)
    lim1 = 1.0 / jnp.sqrt(in_channels)
    lim2 = 1.0 / jnp.sqrt(hidden_dim)
    w1 = jax.random.uniform(k1, (in_channels, hidden_dim), jnp.float32, -lim1, lim1)
    b1 = jax.random.uniform(k2, (hidden_dim,), jnp.float32, -lim1, lim1)
    w2 = jax.random.uniform(k3, (hidden_dim, NUM_CLASSES), jnp.float32, -lim2, lim2)
    b2 = jax.random.uniform(k4, (NUM_CLASSES,), jnp.float32, -lim2, lim2)
    return w1, b1, w2, b2


def reference_forward(x, w1, b1, w2, b2):
    h = jnp.maximum(x @ w1 + b1, 0.0)
    return h @ w2 + b2


if __name__ == "__main__":
    key = jax.random.PRNGKey(0)
    kx, kp = jax.random.split(key)

    # N deliberately NOT a multiple of the tile size to exercise the ragged
    # (partial trailing block) path; auto block_m -> 256, grid = 2 steps.
    N, IN_CHANNELS, HIDDEN = 300, 16, 32
    x = jax.random.normal(kx, (N, IN_CHANNELS), jnp.float32)
    w1, b1, w2, b2 = init_params(kp, IN_CHANNELS, HIDDEN)

    ref = reference_forward(x, w1, b1, w2, b2)

    # Default f32 path.
    logits = jax.block_until_ready(node_width_predictor(x, w1, b1, w2, b2))
    assert logits.shape == (N, NUM_CLASSES)
    assert jnp.allclose(logits, ref, atol=1e-5, rtol=1e-5), "f32 mismatch vs reference"

    # Optional in-kernel bf16 MXU path (v5e-friendly); looser tolerance.
    logits_bf16 = jax.block_until_ready(
        node_width_predictor(x, w1, b1, w2, b2, mxu_dtype=jnp.bfloat16))
    assert jnp.allclose(logits_bf16, ref, atol=1e-1, rtol=5e-2), "bf16 mismatch vs reference"

    print("KERNEL_OK")
</pallas_src>

<mosaic_0001>
module attributes {stable_mosaic.version = 11 : i64} {
  func.func @_mlp_kernel(%arg0: i32, %arg1: memref<256x16xf32, #tpu.memory_space<vmem>>, %arg2: memref<16x32xf32, #tpu.memory_space<vmem>>, %arg3: memref<1x32xf32, #tpu.memory_space<vmem>>, %arg4: memref<32x9xf32, #tpu.memory_space<vmem>>, %arg5: memref<1x9xf32, #tpu.memory_space<vmem>>, %arg6: memref<256x9xf32, #tpu.memory_space<vmem>>) attributes {dimension_semantics = [#tpu.dimension_semantics<parallel>], iteration_bounds = array<i64: 2>, scalar_prefetch = 0 : i64, scratch_operands = 0 : i64, tpu.core_type = #tpu.core_type<tc>, window_params = [{transform_indices = @transform_0, window_bounds = array<i64: 256, 16>}, {pipeline_mode = #tpu.pipeline_mode<synchronous>, transform_indices = @transform_1, window_bounds = array<i64: 16, 32>}, {pipeline_mode = #tpu.pipeline_mode<synchronous>, transform_indices = @transform_2, window_bounds = array<i64: 1, 32>}, {pipeline_mode = #tpu.pipeline_mode<synchronous>, transform_indices = @transform_3, window_bounds = array<i64: 32, 9>}, {pipeline_mode = #tpu.pipeline_mode<synchronous>, transform_indices = @transform_4, window_bounds = array<i64: 1, 9>}, {transform_indices = @transform_5, window_bounds = array<i64: 256, 9>}]} {
    %c0 = arith.constant 0 : index
    %c0_0 = arith.constant 0 : index
    %0 = vector.load %arg1[%c0, %c0_0] : memref<256x16xf32, #tpu.memory_space<vmem>>, vector<256x16xf32>
    %c0_1 = arith.constant 0 : index
    %c0_2 = arith.constant 0 : index
    %1 = vector.load %arg2[%c0_1, %c0_2] : memref<16x32xf32, #tpu.memory_space<vmem>>, vector<16x32xf32>
    %c0_3 = arith.constant 0 : index
    %c0_4 = arith.constant 0 : index
    %2 = vector.load %arg4[%c0_3, %c0_4] : memref<32x9xf32, #tpu.memory_space<vmem>>, vector<32x9xf32>
    %cst = arith.constant dense<0.000000e+00> : vector<256x32xf32>
    %3 = tpu.matmul %0, %1, %cst {dimension_numbers = #tpu.dot_dimension_numbers<[1], [0], [0], [1], [0, 0, 1, 1], [], []>} : vector<256x16xf32>, vector<16x32xf32>, vector<256x32xf32> -> vector<256x32xf32>
    %c0_5 = arith.constant 0 : index
    %c0_6 = arith.constant 0 : index
    %4 = vector.load %arg3[%c0_5, %c0_6] : memref<1x32xf32, #tpu.memory_space<vmem>>, vector<1x32xf32>
    %5 = vector.broadcast %4 : vector<1x32xf32> to vector<256x32xf32>
    %6 = arith.addf %3, %5 : vector<256x32xf32>
    %cst_7 = arith.constant 0.000000e+00 : f32
    %7 = vector.broadcast %cst_7 : f32 to vector<256x32xf32>
    %8 = arith.maximumf %6, %7 : vector<256x32xf32>
    %cst_8 = arith.constant dense<0.000000e+00> : vector<256x9xf32>
    %9 = tpu.matmul %8, %2, %cst_8 {dimension_numbers = #tpu.dot_dimension_numbers<[1], [0], [0], [1], [0, 0, 1, 1], [], []>} : vector<256x32xf32>, vector<32x9xf32>, vector<256x9xf32> -> vector<256x9xf32>
    %c0_9 = arith.constant 0 : index
    %c0_10 = arith.constant 0 : index
    %10 = vector.load %arg5[%c0_9, %c0_10] : memref<1x9xf32, #tpu.memory_space<vmem>>, vector<1x9xf32>
    %11 = vector.broadcast %10 : vector<1x9xf32> to vector<256x9xf32>
    %12 = arith.addf %9, %11 : vector<256x9xf32>
    %c0_11 = arith.constant 0 : index
    %c0_12 = arith.constant 0 : index
    %13 = vector.load %arg6[%c0_11, %c0_12] : memref<256x9xf32, #tpu.memory_space<vmem>>, vector<256x9xf32>
    tpu.vector_store %arg6[%c0_11, %c0_12], %12 {strides = array<i32>} : memref<256x9xf32, #tpu.memory_space<vmem>>, vector<256x9xf32>,
    return
  }
  func.func @transform_0(%arg0: i32) -> (i32, i32) {
    %c0_i32 = arith.constant 0 : i32
    %c0_i32_0 = arith.constant 0 : i32
    return %arg0, %c0_i32 : i32, i32
  }
  func.func @transform_1(%arg0: i32) -> (i32, i32) {
    %c0_i32 = arith.constant 0 : i32
    %c0_i32_0 = arith.constant 0 : i32
    %c0_i32_1 = arith.constant 0 : i32
    return %c0_i32, %c0_i32_0 : i32, i32
  }
  func.func @transform_2(%arg0: i32) -> (i32, i32) {
    %c0_i32 = arith.constant 0 : i32
    %c0_i32_0 = arith.constant 0 : i32
    %c0_i32_1 = arith.constant 0 : i32
    return %c0_i32, %c0_i32_0 : i32, i32
  }
  func.func @transform_3(%arg0: i32) -> (i32, i32) {
    %c0_i32 = arith.constant 0 : i32
    %c0_i32_0 = arith.constant 0 : i32
    %c0_i32_1 = arith.constant 0 : i32
    return %c0_i32, %c0_i32_0 : i32, i32
  }
  func.func @transform_4(%arg0: i32) -> (i32, i32) {
    %c0_i32 = arith.constant 0 : i32
    %c0_i32_0 = arith.constant 0 : i32
    %c0_i32_1 = arith.constant 0 : i32
    return %c0_i32, %c0_i32_0 : i32, i32
  }
  func.func @transform_5(%arg0: i32) -> (i32, i32) {
    %c0_i32 = arith.constant 0 : i32
    %c0_i32_0 = arith.constant 0 : i32
    return %arg0, %c0_i32 : i32, i32
  }
}

</mosaic_0001>

<llo_original>
// kernel: node_width_predictor.1
$region0: #{node_width_predictor.1}
  #allocation0 [shape = 'u32[]', space=smem, size = 0x4, offset = 0x4, fixed_abs, tag = 'smem constant byte address 0x4 - core index']
  #allocation1 [shape = 'u32[144,128]{1,0:T(1,128)}', space=vmem, size = 0x12000, scoped, tag = 'internal scratch']
  %s0 = inlined_call_operand.vmem [shape: f32[300,16], index: 0, kind: input, shape index: {}]
  %s1 = inlined_call_operand.vmem [shape: f32[16,32], index: 1, kind: input, shape index: {}]
  %s2 = inlined_call_operand.vmem [shape: f32[1,32], index: 2, kind: input, shape index: {}]
  %s3 = inlined_call_operand.vmem [shape: f32[32,9], index: 3, kind: input, shape index: {}]
  %s4 = inlined_call_operand.vmem [shape: f32[1,9], index: 4, kind: input, shape index: {}]
  %s5 = inlined_call_operand.vmem [shape: f32[300,9], index: 5, kind: output, shape index: {}]
  %s6 = sld [smem:[#allocation0]]
  $region101: #{node_width_predictor.1} parent=0
    _
  %s8 = ssub.s32 1, %s6
  %s9 = scalar_select 0, %s8, %s6
  $region1: #{node_width_predictor.1} parent=0
    #allocation2 [shape = 'u8[262144]{0}', space=vmem, size = 0x40000, scoped, tag = 'output window, operand 0']
    loop: start=0, step=1, limit=4
    $region2: #{node_width_predictor.1} parent=1 // loop_pre_header
      _
    $region3: #{node_width_predictor.1} parent=1 // loop_header
      %s11 = sphi 0, %s15
      %p12 = scmp.ge.s32.totalorder %s11, 4
      %s21 = sphi 0, %s23
      %s24 = sphi 0, %s21
      %s25 = sphi 0, %s24
      %s41 = sphi 0, %s25
      %s45 = sphi 0, %s45
      %s47 = sphi 0, %s45
      %s48 = sphi 0, %s47
      %s62 = sphi 0, %s48
      %s66 = sphi 0, %s66
      %s68 = sphi 0, %s66
      %s69 = sphi 0, %s68
      %s83 = sphi 0, %s69
      %s87 = sphi 0, %s87
      %s89 = sphi 0, %s87
      %s90 = sphi 0, %s89
      %s104 = sphi 0, %s90
      %s108 = sphi 0, %s108
      %s110 = sphi 0, %s108
      %s111 = sphi 0, %s110
      %s125 = sphi 0, %s111
      %s131 = sphi 0, %s133
      %s134 = sphi 0, %s131
      %s135 = sphi 0, %s134
      %s151 = sphi 0, %s135
    $region4: #{node_width_predictor.1} parent=1 // loop_header_branch
      %14 = sbr.rel (%p12) target = $region8
    $region5: #{node_width_predictor.1} parent=1 // loop_body
      %s16 = ssub.s32 %s11, 1
      %s17 = ssub.s32 %s11, 2
      %s18 = sadd.s32 %s11, 1
      %s19 = ssub.s32 %s11, %s18
      %p20 = scmp.eq.s32.totalorder %s19, 0
      %s22 = sadd.s32 %s21, 1
      %s23 = scalar_select %p20, %s21, %s22
      %p26 = pneg %p20
      %p27 = scmp.eq.s32.totalorder %s11, 1
      %p28 = por %p26, %p27
      %p29 = scmp.ne.s32.totalorder %s21, %s24
      %p30 = scmp.eq.s32.totalorder %s11, 0
      %p31 = por %p29, %p30
      %p32 = scmp.ne.s32.totalorder %s21, %s24
      %p33 = scmp.eq.s32.totalorder %s16, 1
      %p34 = por %p32, %p33
      %p35 = scmp.ne.s32.totalorder %s24, %s25
      %p36 = scmp.eq.s32.totalorder %s16, 0
      %p37 = por %p35, %p36
      %p38 = scmp.ne.s32.totalorder %s24, %s25
      %p39 = scmp.eq.s32.totalorder %s17, 1
      %p40 = por %p38, %p39
      %p42 = scmp.ne.s32.totalorder %s25, %s41
      %p43 = scmp.eq.s32.totalorder %s17, 0
      %p44 = por %p42, %p43
      %s46 = sadd.s32 %s45, 1
      %p49 = scmp.eq.s32.totalorder %s11, 1
      %p50 = scmp.ne.s32.totalorder %s45, %s47
      %p51 = scmp.eq.s32.totalorder %s11, 0
      %p52 = por %p50, %p51
      %p53 = scmp.ne.s32.totalorder %s45, %s47
      %p54 = scmp.eq.s32.totalorder %s16, 1
      %p55 = por %p53, %p54
      %p56 = scmp.ne.s32.totalorder %s47, %s48
      %p57 = scmp.eq.s32.totalorder %s16, 0
      %p58 = por %p56, %p57
      %p59 = scmp.ne.s32.totalorder %s47, %s48
      %p60 = scmp.eq.s32.totalorder %s17, 1
      %p61 = por %p59, %p60
      %p63 = scmp.ne.s32.totalorder %s48, %s62
      %p64 = scmp.eq.s32.totalorder %s17, 0
      %p65 = por %p63, %p64
      %s67 = sadd.s32 %s66, 1
      %p70 = scmp.eq.s32.totalorder %s11, 1
      %p71 = scmp.ne.s32.totalorder %s66, %s68
      %p72 = scmp.eq.s32.totalorder %s11, 0
      %p73 = por %p71, %p72
      %p74 = scmp.ne.s32.totalorder %s66, %s68
      %p75 = scmp.eq.s32.totalorder %s16, 1
      %p76 = por %p74, %p75
      %p77 = scmp.ne.s32.totalorder %s68, %s69
      %p78 = scmp.eq.s32.totalorder %s16, 0
      %p79 = por %p77, %p78
      %p80 = scmp.ne.s32.totalorder %s68, %s69
      %p81 = scmp.eq.s32.totalorder %s17, 1
      %p82 = por %p80, %p81
      %p84 = scmp.ne.s32.totalorder %s69, %s83
      %p85 = scmp.eq.s32.totalorder %s17, 0
      %p86 = por %p84, %p85
      %s88 = sadd.s32 %s87, 1
      %p91 = scmp.eq.s32.totalorder %s11, 1
      %p92 = scmp.ne.s32.totalorder %s87, %s89
      %p93 = scmp.eq.s32.totalorder %s11, 0
      %p94 = por %p92, %p93
      %p95 = scmp.ne.s32.totalorder %s87, %s89
      %p96 = scmp.eq.s32.totalorder %s16, 1
      %p97 = por %p95, %p96
      %p98 = scmp.ne.s32.totalorder %s89, %s90
      %p99 = scmp.eq.s32.totalorder %s16, 0
      %p100 = por %p98, %p99
      %p101 = scmp.ne.s32.totalorder %s89, %s90
      %p102 = scmp.eq.s32.totalorder %s17, 1
      %p103 = por %p101, %p102
      %p105 = scmp.ne.s32.totalorder %s90, %s104
      %p106 = scmp.eq.s32.totalorder %s17, 0
      %p107 = por %p105, %p106
      %s109 = sadd.s32 %s108, 1
      %p112 = scmp.eq.s32.totalorder %s11, 1
      %p113 = scmp.ne.s32.totalorder %s108, %s110
      %p114 = scmp.eq.s32.totalorder %s11, 0
      %p115 = por %p113, %p114
      %p116 = scmp.ne.s32.totalorder %s108, %s110
      %p117 = scmp.eq.s32.totalorder %s16, 1
      %p118 = por %p116, %p117
      %p119 = scmp.ne.s32.totalorder %s110, %s111
      %p120 = scmp.eq.s32.totalorder %s16, 0
      %p121 = por %p119, %p120
      %p122 = scmp.ne.s32.totalorder %s110, %s111
      %p123 = scmp.eq.s32.totalorder %s17, 1
      %p124 = por %p122, %p123
      %p126 = scmp.ne.s32.totalorder %s111, %s125
      %p127 = scmp.eq.s32.totalorder %s17, 0
      %p128 = por %p126, %p127
      %s129 = ssub.s32 %s11, %s18
      %p130 = scmp.eq.s32.totalorder %s129, 0
      %s132 = sadd.s32 %s131, 1
      %s133 = scalar_select %p130, %s131, %s132
      %p136 = pneg %p130
      %p137 = scmp.eq.s32.totalorder %s11, 1
      %p138 = por %p136, %p137
      %p139 = scmp.ne.s32.totalorder %s131, %s134
      %p140 = scmp.eq.s32.totalorder %s11, 0
      %p141 = por %p139, %p140
      %p142 = scmp.ne.s32.totalorder %s131, %s134
      %p143 = scmp.eq.s32.totalorder %s16, 1
      %p144 = por %p142, %p143
      %p145 = scmp.ne.s32.totalorder %s134, %s135
      %p146 = scmp.eq.s32.totalorder %s16, 0
      %p147 = por %p145, %p146
      %p148 = scmp.ne.s32.totalorder %s134, %s135
      %p149 = scmp.eq.s32.totalorder %s17, 1
      %p150 = por %p148, %p149
      %p152 = scmp.ne.s32.totalorder %s135, %s151
      %p153 = scmp.eq.s32.totalorder %s17, 0
      %p154 = por %p152, %p153
      %p155 = scmp.le.s32.totalorder 1, %s11
      %p156 = scmp.lt.s32.totalorder %s11, 3
      %p157 = pnand %p155, %p156
      %p158 = pneg %p157
      // Predicated region
      $region9: #{node_width_predictor.1} parent=5 // pred_check
        _
      $region10: #{node_width_predictor.1} parent=5 // pred_check_branch
        %160 = sbr.rel (%p157) target = $region12
      $region11: #{node_width_predictor.1} parent=5 // pred_region
        %s161 = ssub.s32 %s11, 1
        // Predicated region
        $region13: #{node_width_predictor.1} parent=11 // pred_check
          %p162 = pneg %p58
        $region14: #{node_width_predictor.1} parent=11 // pred_check_branch
          %164 = sbr.rel (%p162) target = $region16
        $region15: #{node_width_predictor.1} parent=11 // pred_region
          _
        $region16: #{node_width_predictor.1} parent=11 // pred_fallthru
          _
        // Predicated region
        $region17: #{node_width_predictor.1} parent=11 // pred_check
          %p165 = pneg %p79
        $region18: #{node_width_predictor.1} parent=11 // pred_check_branch
          %167 = sbr.rel (%p165) target = $region20
        $region19: #{node_width_predictor.1} parent=11 // pred_region
          _
        $region20: #{node_width_predictor.1} parent=11 // pred_fallthru
          _
        // Predicated region
        $region21: #{node_width_predictor.1} parent=11 // pred_check
          %p168 = pneg %p100
        $region22: #{node_width_predictor.1} parent=11 // pred_check_branch
          %170 = sbr.rel (%p168) target = $region24
        $region23: #{node_width_predictor.1} parent=11 // pred_region
          _
        $region24: #{node_width_predictor.1} parent=11 // pred_fallthru
          _
        // Predicated region
        $region25: #{node_width_predictor.1} parent=11 // pred_check
          %p171 = pneg %p121
        $region26: #{node_width_predictor.1} parent=11 // pred_check_branch
          %173 = sbr.rel (%p171) target = $region28
        $region27: #{node_width_predictor.1} parent=11 // pred_region
          _
        $region28: #{node_width_predictor.1} parent=11 // pred_fallthru
          _
      $region12: #{node_width_predictor.1} parent=5 // pred_fallthru
        _
      %p174 = scmp.lt.s32.totalorder %s11, 2
      // Predicated region
      $region29: #{node_width_predictor.1} parent=5 // pred_check
        %p175 = pneg %p174
      $region30: #{node_width_predictor.1} parent=5 // pred_check_branch
        %177 = sbr.rel (%p175) target = $region32
      $region31: #{node_width_predictor.1} parent=5 // pred_region
        // Predicated region
        $region33: #{node_width_predictor.1} parent=31 // pred_check
          %p178 = pneg %p31
        $region34: #{node_width_predictor.1} parent=31 // pred_check_branch
          %180 = sbr.rel (%p178) target = $region36
        $region35: #{node_width_predictor.1} parent=31 // pred_region
          %s181 = smul.u32 32, %s11
          %s182 = ssub.s32 38, %s181
          %p183 = scmp.lt.s32.totalorder %s182, 32
          %s184 = scalar_select %p183, %s182, 32
          %s185 = smul.u32 128, %s184
          %p186 = scmp.lt.s32.totalorder %s181, 37
          %s187 = scalar_select %p186, %s181, 37
          %s188 = smul.addr %s187, 8
          %s189 = scalar_lea.vmem %s0, %s188
          %s190 = smul.u32 32, %s11
          %s191 = ssub.s32 38, %s190
          %p192 = scmp.lt.s32.totalorder %s191, 32
          %s193 = scalar_select %p192, %s191, 32
          %s194 = smul.u32 128, %s193
        $region36: #{node_width_predictor.1} parent=31 // pred_fallthru
          _
      $region32: #{node_width_predictor.1} parent=5 // pred_fallthru
        _
      %p195 = scmp.le.s32.totalorder 1, %s11
      %p196 = scmp.lt.s32.totalorder %s11, 3
      %p197 = pnand %p195, %p196
      %p198 = pneg %p197
      // Predicated region
      $region37: #{node_width_predictor.1} parent=5 // pred_check
        _
      $region38: #{node_width_predictor.1} parent=5 // pred_check_branch
        %200 = sbr.rel (%p197) target = $region40
      $region39: #{node_width_predictor.1} parent=5 // pred_region
        %s201 = ssub.s32 %s11, 1
        %s202 = smul.u32 32, %s16
        %s203 = ssub.s32 38, %s202
        %p204 = scmp.lt.s32.totalorder %s203, 32
        %s205 = scalar_select %p204, %s203, 32
        %s206 = smul.u32 128, %s205
        %p207 = scmp.lt.s32.totalorder %s202, 37
        %s208 = scalar_select %p207, %s202, 37
        %s209 = smul.addr %s208, 8
        %s210 = scalar_lea.vmem %s0, %s209
        %p211 = pneg %p37
        %p212 = pneg %p34
        %p213 = pneg %p58
        %p214 = pneg %p55
        %p215 = pneg %p79
        %p216 = pneg %p76
        %p217 = pneg %p100
        %p218 = pneg %p97
        %p219 = pneg %p121
        %p220 = pneg %p118
        %p221 = pneg %p147
        %p222 = pneg %p144
        %s223 = sand.u32 %s134, 1
        %s224 = sand.u32 %s134, 1
        %s225 = smul.addr %s224, 256
        %s226 = scalar_lea.vmem [#allocation2], %s225
        %s227 = smul.u32 32, %s16
        %s228 = ssub.s32 38, %s227
        %p229 = scmp.lt.s32.totalorder %s228, 32
        %s230 = scalar_select %p229, %s228, 32
        %s231 = smul.u32 128, %s230
        %p232 = scmp.lt.s32.totalorder %s227, 37
        %s233 = scalar_select %p232, %s227, 37
        %s234 = smul.addr %s233, 8
        %s235 = scalar_lea.vmem %s0, %s234
        %s236 = smul.u32 32, %s16
        %s237 = ssub.s32 38, %s236
        %p238 = scmp.lt.s32.totalorder %s237, 32
        %s239 = scalar_select %p238, %s237, 32
        %s240 = smul.u32 128, %s239
        %s241 = smul.u32 32, %s16
        %s242 = ssub.s32 38, %s241
        %p243 = scmp.lt.s32.totalorder %s242, 32
        %s244 = scalar_select %p243, %s242, 32
        %s245 = smul.u32 128, %s244
        %v246 = vld [vmem:[%s235] sm:$0xff]
        %v247 = vld [vmem:[%s235 + $0x8] sm:$0xff]
        %v248 = vld [vmem:[%s235 + $0x10] sm:$0xff]
        %v249 = vld [vmem:[%s235 + $0x18] sm:$0xff]
        %v250 = vld [vmem:[%s235 + $0x20] sm:$0xff]
        %v251 = vld [vmem:[%s235 + $0x28] sm:$0xff]
        %v252 = vld [vmem:[%s235 + $0x30] sm:$0xff]
        %v253 = vld [vmem:[%s235 + $0x38] sm:$0xff]
        %v254 = vld [vmem:[%s235 + $0x40] sm:$0xff]
        %v255 = vld [vmem:[%s235 + $0x48] sm:$0xff]
        %v256 = vld [vmem:[%s235 + $0x50] sm:$0xff]
        %v257 = vld [vmem:[%s235 + $0x58] sm:$0xff]
        %v258 = vld [vmem:[%s235 + $0x60] sm:$0xff]
        %v259 = vld [vmem:[%s235 + $0x68] sm:$0xff]
        %v260 = vld [vmem:[%s235 + $0x70] sm:$0xff]
        %v261 = vld [vmem:[%s235 + $0x78] sm:$0xff]
        %v262 = vld [vmem:[%s235 + $0x80] sm:$0xff]
        %v263 = vld [vmem:[%s235 + $0x88] sm:$0xff]
        %v264 = vld [vmem:[%s235 + $0x90] sm:$0xff]
        %v265 = vld [vmem:[%s235 + $0x98] sm:$0xff]
        %v266 = vld [vmem:[%s235 + $0xa0] sm:$0xff]
        %v267 = vld [vmem:[%s235 + $0xa8] sm:$0xff]
        %v268 = vld [vmem:[%s235 + $0xb0] sm:$0xff]
        %v269 = vld [vmem:[%s235 + $0xb8] sm:$0xff]
        %v270 = vld [vmem:[%s235 + $0xc0] sm:$0xff]
        %v271 = vld [vmem:[%s235 + $0xc8] sm:$0xff]
        %v272 = vld [vmem:[%s235 + $0xd0] sm:$0xff]
        %v273 = vld [vmem:[%s235 + $0xd8] sm:$0xff]
        %v274 = vld [vmem:[%s235 + $0xe0] sm:$0xff]
        %v275 = vld [vmem:[%s235 + $0xe8] sm:$0xff]
        %v276 = vld [vmem:[%s235 + $0xf0] sm:$0xff]
        %v277 = vld [vmem:[%s235 + $0xf8] sm:$0xff]
        %v278 = vld [vmem:[%s1] sm:$0xff]
        %v279 = vld [vmem:[%s1 + $0x8] sm:$0xff]
        %v280 = vld [vmem:[%s3] sm:$0xff]
        %v281 = vld [vmem:[%s3 + $0x8] sm:$0xff]
        %v282 = vld [vmem:[%s3 + $0x10] sm:$0xff]
        %v283 = vld [vmem:[%s3 + $0x18] sm:$0xff]
        %v284 = vld [vmem:[%s2] sm:$0x1]
        %v286 = vlaneseq
        %v287 = vshrl.u32 %v286, 7
        %v288 = vsub.s32 0, %v287
        %v289 = vrot.slane %v284, %v288
        %vm291 = vcmask 130048
        %v293 = vsel %vm291, %v246, 0
        %v296 = vsel %vm291, %v247, 0
        %v299 = vsel %vm291, %v248, 0
        %v302 = vsel %vm291, %v249, 0
        %v305 = vsel %vm291, %v250, 0
        %v308 = vsel %vm291, %v251, 0
        %v311 = vsel %vm291, %v252, 0
        %v314 = vsel %vm291, %v253, 0
        %v317 = vsel %vm291, %v254, 0
        %v320 = vsel %vm291, %v255, 0
        %v323 = vsel %vm291, %v256, 0
        %v326 = vsel %vm291, %v257, 0
        %v329 = vsel %vm291, %v258, 0
        %v332 = vsel %vm291, %v259, 0
        %v335 = vsel %vm291, %v260, 0
        %v338 = vsel %vm291, %v261, 0
        %v341 = vsel %vm291, %v262, 0
        %v344 = vsel %vm291, %v263, 0
        %v347 = vsel %vm291, %v264, 0
        %v350 = vsel %vm291, %v265, 0
        %v353 = vsel %vm291, %v266, 0
        %v356 = vsel %vm291, %v267, 0
        %v359 = vsel %vm291, %v268, 0
        %v362 = vsel %vm291, %v269, 0
        %v365 = vsel %vm291, %v270, 0
        %v368 = vsel %vm291, %v271, 0
        %v371 = vsel %vm291, %v272, 0
        %v374 = vsel %vm291, %v273, 0
        %v377 = vsel %vm291, %v274, 0
        %v380 = vsel %vm291, %v275, 0
        %v383 = vsel %vm291, %v276, 0
        %v386 = vsel %vm291, %v277, 0
        %388 = vmatprep.subr.mxu0 0.0
        %389 = vmatpush1.msra.mxu0 0.0
        %390 = vmatprep.subr.mxu0 0.0
        %391 = vmatpush1.msra.mxu0 0.0
        %392 = vmatprep.subr.mxu0 0.0
        %393 = vmatpush1.msra.mxu0 0.0
        %394 = vmatprep.subr.mxu0 0.0
        %395 = vmatpush1.msra.mxu0 0.0
        %396 = vmatprep.subr.mxu0 0.0
        %397 = vmatpush1.msra.mxu0 0.0
        %398 = vmatprep.subr.mxu0 0.0
        %399 = vmatpush1.msra.mxu0 0.0
        %400 = vmatprep.subr.mxu0 0.0
        %401 = vmatpush1.msra.mxu0 0.0
        %402 = vmatprep.subr.mxu0 0.0
        %403 = vmatpush1.msra.mxu0 0.0
        %404 = vmatprep.subr.mxu0 0.0
        %405 = vmatpush1.msra.mxu0 0.0
        %406 = vmatprep.subr.mxu0 0.0
        %407 = vmatpush1.msra.mxu0 0.0
        %408 = vmatprep.subr.mxu0 0.0
        %409 = vmatpush1.msra.mxu0 0.0
        %410 = vmatprep.subr.mxu0 0.0
        %411 = vmatpush1.msra.mxu0 0.0
        %412 = vmatprep.subr.mxu0 0.0
        %413 = vmatpush1.msra.mxu0 0.0
        %414 = vmatprep.subr.mxu0 0.0
        %415 = vmatpush1.msra.mxu0 0.0
        %416 = vmatprep.subr.mxu0 0.0
        %417 = vmatpush1.msra.mxu0 %v279
        %418 = vmatprep.subr.mxu0 0.0
        %419 = vmatpush1.msra.mxu0 %v278
        %420 = vmatprep.subr.mxu0 0.0
        %421 = vmatpush2.msra.mxu0 0.0
        %422 = vmatprep.subr.mxu0 0.0
        %423 = vmatpush2.msra.mxu0 0.0
        %424 = vmatprep.subr.mxu0 0.0
        %425 = vmatpush2.msra.mxu0 0.0
        %426 = vmatprep.subr.mxu0 0.0
        %427 = vmatpush2.msra.mxu0 0.0
        %428 = vmatprep.subr.mxu0 0.0
        %429 = vmatpush2.msra.mxu0 0.0
        %430 = vmatprep.subr.mxu0 0.0
        %431 = vmatpush2.msra.mxu0 0.0
        %432 = vmatprep.subr.mxu0 0.0
        %433 = vmatpush2.msra.mxu0 0.0
        %434 = vmatprep.subr.mxu0 0.0
        %435 = vmatpush2.msra.mxu0 0.0
        %436 = vmatprep.subr.mxu0 0.0
        %437 = vmatpush2.msra.mxu0 0.0
        %438 = vmatprep.subr.mxu0 0.0
        %439 = vmatpush2.msra.mxu0 0.0
        %440 = vmatprep.subr.mxu0 0.0
        %441 = vmatpush2.msra.mxu0 0.0
        %442 = vmatprep.subr.mxu0 0.0
        %443 = vmatpush2.msra.mxu0 0.0
        %444 = vmatprep.subr.mxu0 0.0
        %445 = vmatpush2.msra.mxu0 0.0
        %446 = vmatprep.subr.mxu0 0.0
        %447 = vmatpush2.msra.mxu0 0.0
        %448 = vmatprep.subr.mxu0 0.0
        %449 = vmatpush2.msra.mxu0 0.0
        %450 = vmatprep.subr.mxu0 0.0
        %451 = vmatpush2.msra.mxu0 0.0
        %452 = vmatprep.mubr.f32.mxu0 0.0
        %453 = vmatmul.mubr.f32.gmra.mxu0 %v293
        %v454 = vpop.f32.mrf.mxu0
        %v455 = vadd.f32 %v289, %v454
        %v456 = vpop.f32.mrf.mxu0
        %457 = vmatprep.mubr.f32.mxu0 0.0
        %458 = vmatmul.mubr.f32.gmra.mxu0 %v296
        %v459 = vpop.f32.mrf.mxu0
        %v460 = vadd.f32 %v289, %v459
        %v461 = vpop.f32.mrf.mxu0
        %462 = vmatprep.mubr.f32.mxu0 0.0
        %463 = vmatmul.mubr.f32.gmra.mxu0 %v299
        %v464 = vpop.f32.mrf.mxu0
        %v465 = vadd.f32 %v289, %v464
        %v466 = vpop.f32.mrf.mxu0
        %467 = vmatprep.mubr.f32.mxu0 0.0
        %468 = vmatmul.mubr.f32.gmra.mxu0 %v302
        %v469 = vpop.f32.mrf.mxu0
        %v470 = vadd.f32 %v289, %v469
        %v471 = vpop.f32.mrf.mxu0
        %472 = vmatprep.mubr.f32.mxu0 0.0
        %473 = vmatmul.mubr.f32.gmra.mxu0 %v305
        %v474 = vpop.f32.mrf.mxu0
        %v475 = vadd.f32 %v289, %v474
        %v476 = vpop.f32.mrf.mxu0
        %477 = vmatprep.mubr.f32.mxu0 0.0
        %478 = vmatmul.mubr.f32.gmra.mxu0 %v308
        %v479 = vpop.f32.mrf.mxu0
        %v480 = vadd.f32 %v289, %v479
        %v481 = vpop.f32.mrf.mxu0
        %482 = vmatprep.mubr.f32.mxu0 0.0
        %483 = vmatmul.mubr.f32.gmra.mxu0 %v311
        %v484 = vpop.f32.mrf.mxu0
        %v485 = vadd.f32 %v289, %v484
        %v486 = vpop.f32.mrf.mxu0
        %487 = vmatprep.mubr.f32.mxu0 0.0
        %488 = vmatmul.mubr.f32.gmra.mxu0 %v314
        %v489 = vpop.f32.mrf.mxu0
        %v490 = vadd.f32 %v289, %v489
        %v491 = vpop.f32.mrf.mxu0
        %492 = vmatprep.mubr.f32.mxu0 0.0
        %493 = vmatmul.mubr.f32.gmra.mxu0 %v317
        %v494 = vpop.f32.mrf.mxu0
        %v495 = vadd.f32 %v289, %v494
        %v496 = vpop.f32.mrf.mxu0
        %497 = vmatprep.mubr.f32.mxu0 0.0
        %498 = vmatmul.mubr.f32.gmra.mxu0 %v320
        %v499 = vpop.f32.mrf.mxu0
        %v500 = vadd.f32 %v289, %v499
        %v501 = vpop.f32.mrf.mxu0
        %502 = vmatprep.mubr.f32.mxu0 0.0
        %503 = vmatmul.mubr.f32.gmra.mxu0 %v323
        %v504 = vpop.f32.mrf.mxu0
        %v505 = vadd.f32 %v289, %v504
        %v506 = vpop.f32.mrf.mxu0
        %507 = vmatprep.mubr.f32.mxu0 0.0
        %508 = vmatmul.mubr.f32.gmra.mxu0 %v326
        %v509 = vpop.f32.mrf.mxu0
        %v510 = vadd.f32 %v289, %v509
        %v511 = vpop.f32.mrf.mxu0
        %512 = vmatprep.mubr.f32.mxu0 0.0
        %513 = vmatmul.mubr.f32.gmra.mxu0 %v329
        %v514 = vpop.f32.mrf.mxu0
        %v515 = vadd.f32 %v289, %v514
        %v516 = vpop.f32.mrf.mxu0
        %517 = vmatprep.mubr.f32.mxu0 0.0
        %518 = vmatmul.mubr.f32.gmra.mxu0 %v332
        %v519 = vpop.f32.mrf.mxu0
        %v520 = vadd.f32 %v289, %v519
        %v521 = vpop.f32.mrf.mxu0
        %522 = vmatprep.mubr.f32.mxu0 0.0
        %523 = vmatmul.mubr.f32.gmra.mxu0 %v335
        %v524 = vpop.f32.mrf.mxu0
        %v525 = vadd.f32 %v289, %v524
        %v526 = vpop.f32.mrf.mxu0
        %527 = vmatprep.mubr.f32.mxu0 0.0
        %528 = vmatmul.mubr.f32.gmra.mxu0 %v338
        %v529 = vpop.f32.mrf.mxu0
        %v530 = vadd.f32 %v289, %v529
        %v531 = vpop.f32.mrf.mxu0
        %532 = vmatprep.mubr.f32.mxu0 0.0
        %533 = vmatmul.mubr.f32.gmra.mxu0 %v341
        %v534 = vpop.f32.mrf.mxu0
        %v535 = vadd.f32 %v289, %v534
        %v536 = vpop.f32.mrf.mxu0
        %537 = vmatprep.mubr.f32.mxu0 0.0
        %538 = vmatmul.mubr.f32.gmra.mxu0 %v344
        %v539 = vpop.f32.mrf.mxu0
        %v540 = vadd.f32 %v289, %v539
        %v541 = vpop.f32.mrf.mxu0
        %542 = vmatprep.mubr.f32.mxu0 0.0
        %543 = vmatmul.mubr.f32.gmra.mxu0 %v347
        %v544 = vpop.f32.mrf.mxu0
        %v545 = vadd.f32 %v289, %v544
        %v546 = vpop.f32.mrf.mxu0
        %547 = vmatprep.mubr.f32.mxu0 0.0
        %548 = vmatmul.mubr.f32.gmra.mxu0 %v350
        %v549 = vpop.f32.mrf.mxu0
        %v550 = vadd.f32 %v289, %v549
        %v551 = vpop.f32.mrf.mxu0
        %552 = vmatprep.mubr.f32.mxu0 0.0
        %553 = vmatmul.mubr.f32.gmra.mxu0 %v353
        %v554 = vpop.f32.mrf.mxu0
        %v555 = vadd.f32 %v289, %v554
        %v556 = vpop.f32.mrf.mxu0
        %557 = vmatprep.mubr.f32.mxu0 0.0
        %558 = vmatmul.mubr.f32.gmra.mxu0 %v356
        %v559 = vpop.f32.mrf.mxu0
        %v560 = vadd.f32 %v289, %v559
        %v561 = vpop.f32.mrf.mxu0
        %562 = vmatprep.mubr.f32.mxu0 0.0
        %563 = vmatmul.mubr.f32.gmra.mxu0 %v359
        %v564 = vpop.f32.mrf.mxu0
        %v565 = vadd.f32 %v289, %v564
        %v566 = vpop.f32.mrf.mxu0
        %567 = vmatprep.mubr.f32.mxu0 0.0
        %568 = vmatmul.mubr.f32.gmra.mxu0 %v362
        %v569 = vpop.f32.mrf.mxu0
        %v570 = vadd.f32 %v289, %v569
        %v571 = vpop.f32.mrf.mxu0
        %572 = vmatprep.mubr.f32.mxu0 0.0
        %573 = vmatmul.mubr.f32.gmra.mxu0 %v365
        %v574 = vpop.f32.mrf.mxu0
        %v575 = vadd.f32 %v289, %v574
        %v576 = vpop.f32.mrf.mxu0
        %577 = vmatprep.mubr.f32.mxu0 0.0
        %578 = vmatmul.mubr.f32.gmra.mxu0 %v368
        %v579 = vpop.f32.mrf.mxu0
        %v580 = vadd.f32 %v289, %v579
        %v581 = vpop.f32.mrf.mxu0
        %582 = vmatprep.mubr.f32.mxu0 0.0
        %583 = vmatmul.mubr.f32.gmra.mxu0 %v371
        %v584 = vpop.f32.mrf.mxu0
        %v585 = vadd.f32 %v289, %v584
        %v586 = vpop.f32.mrf.mxu0
        %587 = vmatprep.mubr.f32.mxu0 0.0
        %588 = vmatmul.mubr.f32.gmra.mxu0 %v374
        %v589 = vpop.f32.mrf.mxu0
        %v590 = vadd.f32 %v289, %v589
        %v591 = vpop.f32.mrf.mxu0
        %592 = vmatprep.mubr.f32.mxu0 0.0
        %593 = vmatmul.mubr.f32.gmra.mxu0 %v377
        %v594 = vpop.f32.mrf.mxu0
        %v595 = vadd.f32 %v289, %v594
        %v596 = vpop.f32.mrf.mxu0
        %597 = vmatprep.mubr.f32.mxu0 0.0
        %598 = vmatmul.mubr.f32.gmra.mxu0 %v380
        %v599 = vpop.f32.mrf.mxu0
        %v600 = vadd.f32 %v289, %v599
        %v601 = vpop.f32.mrf.mxu0
        %602 = vmatprep.mubr.f32.mxu0 0.0
        %603 = vmatmul.mubr.f32.gmra.mxu0 %v383
        %v604 = vpop.f32.mrf.mxu0
        %v605 = vadd.f32 %v289, %v604
        %v606 = vpop.f32.mrf.mxu0
        %607 = vmatprep.mubr.f32.mxu0 0.0
        %608 = vmatmul.mubr.f32.gmra.mxu0 %v386
        %v609 = vpop.f32.mrf.mxu0
        %v610 = vadd.f32 %v289, %v609
        %v611 = vpop.f32.mrf.mxu0
        %612 = vdwg.mxu0
        %v613 = vmax.f32 %v455, 0.0
        %v614 = vmax.f32 %v460, 0.0
        %v615 = vmax.f32 %v465, 0.0
        %v616 = vmax.f32 %v470, 0.0
        %v617 = vmax.f32 %v475, 0.0
        %v618 = vmax.f32 %v480, 0.0
        %v619 = vmax.f32 %v485, 0.0
        %v620 = vmax.f32 %v490, 0.0
        %v621 = vmax.f32 %v495, 0.0
        %v622 = vmax.f32 %v500, 0.0
        %v623 = vmax.f32 %v505, 0.0
        %v624 = vmax.f32 %v510, 0.0
        %v625 = vmax.f32 %v515, 0.0
        %v626 = vmax.f32 %v520, 0.0
        %v627 = vmax.f32 %v525, 0.0
        %v628 = vmax.f32 %v530, 0.0
        %v629 = vmax.f32 %v535, 0.0
        %v630 = vmax.f32 %v540, 0.0
        %v631 = vmax.f32 %v545, 0.0
        %v632 = vmax.f32 %v550, 0.0
        %v633 = vmax.f32 %v555, 0.0
        %v634 = vmax.f32 %v560, 0.0
        %v635 = vmax.f32 %v565, 0.0
        %v636 = vmax.f32 %v570, 0.0
        %v637 = vmax.f32 %v575, 0.0
        %v638 = vmax.f32 %v580, 0.0
        %v639 = vmax.f32 %v585, 0.0
        %v640 = vmax.f32 %v590, 0.0
        %v641 = vmax.f32 %v595, 0.0
        %v642 = vmax.f32 %v600, 0.0
        %v643 = vmax.f32 %v605, 0.0
        %v644 = vmax.f32 %v610, 0.0
        %v645 = vld [vmem:[%s4] sm:$0x1]
        %v647 = vlaneseq
        %v648 = vshrl.u32 %v647, 7
        %v649 = vsub.s32 0, %v648
        %v650 = vrot.slane %v645, %v649
        %vm652 = vcmask 261120
        %v654 = vsel %vm652, %v613, 0
        %v657 = vsel %vm652, %v614, 0
        %v660 = vsel %vm652, %v615, 0
        %v663 = vsel %vm652, %v616, 0
        %v666 = vsel %vm652, %v617, 0
        %v669 = vsel %vm652, %v618, 0
        %v672 = vsel %vm652, %v619, 0
        %v675 = vsel %vm652, %v620, 0
        %v678 = vsel %vm652, %v621, 0
        %v681 = vsel %vm652, %v622, 0
        %v684 = vsel %vm652, %v623, 0
        %v687 = vsel %vm652, %v624, 0
        %v690 = vsel %vm652, %v625, 0
        %v693 = vsel %vm652, %v626, 0
        %v696 = vsel %vm652, %v627, 0
        %v699 = vsel %vm652, %v628, 0
        %v702 = vsel %vm652, %v629, 0
        %v705 = vsel %vm652, %v630, 0
        %v708 = vsel %vm652, %v631, 0
        %v711 = vsel %vm652, %v632, 0
        %v714 = vsel %vm652, %v633, 0
        %v717 = vsel %vm652, %v634, 0
        %v720 = vsel %vm652, %v635, 0
        %v723 = vsel %vm652, %v636, 0
        %v726 = vsel %vm652, %v637, 0
        %v729 = vsel %vm652, %v638, 0
        %v732 = vsel %vm652, %v639, 0
        %v735 = vsel %vm652, %v640, 0
        %v738 = vsel %vm652, %v641, 0
        %v741 = vsel %vm652, %v642, 0
        %v744 = vsel %vm652, %v643, 0
        %v747 = vsel %vm652, %v644, 0
        %749 = vmatprep.subr.mxu0 0.0
        %750 = vmatpush1.msra.mxu0 0.0
        %751 = vmatprep.subr.mxu0 0.0
        %752 = vmatpush1.msra.mxu0 0.0
        %753 = vmatprep.subr.mxu0 0.0
        %754 = vmatpush1.msra.mxu0 0.0
        %755 = vmatprep.subr.mxu0 0.0
        %756 = vmatpush1.msra.mxu0 0.0
        %757 = vmatprep.subr.mxu0 0.0
        %758 = vmatpush1.msra.mxu0 0.0
        %759 = vmatprep.subr.mxu0 0.0
        %760 = vmatpush1.msra.mxu0 0.0
        %761 = vmatprep.subr.mxu0 0.0
        %762 = vmatpush1.msra.mxu0 0.0
        %763 = vmatprep.subr.mxu0 0.0
        %764 = vmatpush1.msra.mxu0 0.0
        %765 = vmatprep.subr.mxu0 0.0
        %766 = vmatpush1.msra.mxu0 0.0
        %767 = vmatprep.subr.mxu0 0.0
        %768 = vmatpush1.msra.mxu0 0.0
        %769 = vmatprep.subr.mxu0 0.0
        %770 = vmatpush1.msra.mxu0 0.0
        %771 = vmatprep.subr.mxu0 0.0
        %772 = vmatpush1.msra.mxu0 0.0
        %773 = vmatprep.subr.mxu0 0.0
        %774 = vmatpush1.msra.mxu0 %v283
        %775 = vmatprep.subr.mxu0 0.0
        %776 = vmatpush1.msra.mxu0 %v282
        %777 = vmatprep.subr.mxu0 0.0
        %778 = vmatpush1.msra.mxu0 %v281
        %779 = vmatprep.subr.mxu0 0.0
        %780 = vmatpush1.msra.mxu0 %v280
        %781 = vmatprep.subr.mxu0 0.0
        %782 = vmatpush2.msra.mxu0 0.0
        %783 = vmatprep.subr.mxu0 0.0
        %784 = vmatpush2.msra.mxu0 0.0
        %785 = vmatprep.subr.mxu0 0.0
        %786 = vmatpush2.msra.mxu0 0.0
        %787 = vmatprep.subr.mxu0 0.0
        %788 = vmatpush2.msra.mxu0 0.0
        %789 = vmatprep.subr.mxu0 0.0
        %790 = vmatpush2.msra.mxu0 0.0
        %791 = vmatprep.subr.mxu0 0.0
        %792 = vmatpush2.msra.mxu0 0.0
        %793 = vmatprep.subr.mxu0 0.0
        %794 = vmatpush2.msra.mxu0 0.0
        %795 = vmatprep.subr.mxu0 0.0
        %796 = vmatpush2.msra.mxu0 0.0
        %797 = vmatprep.subr.mxu0 0.0
        %798 = vmatpush2.msra.mxu0 0.0
        %799 = vmatprep.subr.mxu0 0.0
        %800 = vmatpush2.msra.mxu0 0.0
        %801 = vmatprep.subr.mxu0 0.0
        %802 = vmatpush2.msra.mxu0 0.0
        %803 = vmatprep.subr.mxu0 0.0
        %804 = vmatpush2.msra.mxu0 0.0
        %805 = vmatprep.subr.mxu0 0.0
        %806 = vmatpush2.msra.mxu0 0.0
        %807 = vmatprep.subr.mxu0 0.0
        %808 = vmatpush2.msra.mxu0 0.0
        %809 = vmatprep.subr.mxu0 0.0
        %810 = vmatpush2.msra.mxu0 0.0
        %811 = vmatprep.subr.mxu0 0.0
        %812 = vmatpush2.msra.mxu0 0.0
        %813 = vmatprep.mubr.f32.mxu0 0.0
        %814 = vmatmul.mubr.f32.gmra.mxu0 %v654
        %v815 = vpop.f32.mrf.mxu0
        %v816 = vadd.f32 %v650, %v815
        %v817 = vpop.f32.mrf.mxu0
        %818 = vmatprep.mubr.f32.mxu0 0.0
        %819 = vmatmul.mubr.f32.gmra.mxu0 %v657
        %v820 = vpop.f32.mrf.mxu0
        %v821 = vadd.f32 %v650, %v820
        %v822 = vpop.f32.mrf.mxu0
        %823 = vmatprep.mubr.f32.mxu0 0.0
        %824 = vmatmul.mubr.f32.gmra.mxu0 %v660
        %v825 = vpop.f32.mrf.mxu0
        %v826 = vadd.f32 %v650, %v825
        %v827 = vpop.f32.mrf.mxu0
        %828 = vmatprep.mubr.f32.mxu0 0.0
        %829 = vmatmul.mubr.f32.gmra.mxu0 %v663
        %v830 = vpop.f32.mrf.mxu0
        %v831 = vadd.f32 %v650, %v830
        %v832 = vpop.f32.mrf.mxu0
        %833 = vmatprep.mubr.f32.mxu0 0.0
        %834 = vmatmul.mubr.f32.gmra.mxu0 %v666
        %v835 = vpop.f32.mrf.mxu0
        %v836 = vadd.f32 %v650, %v835
        %v837 = vpop.f32.mrf.mxu0
        %838 = vmatprep.mubr.f32.mxu0 0.0
        %839 = vmatmul.mubr.f32.gmra.mxu0 %v669
        %v840 = vpop.f32.mrf.mxu0
        %v841 = vadd.f32 %v650, %v840
        %v842 = vpop.f32.mrf.mxu0
        %843 = vmatprep.mubr.f32.mxu0 0.0
        %844 = vmatmul.mubr.f32.gmra.mxu0 %v672
        %v845 = vpop.f32.mrf.mxu0
        %v846 = vadd.f32 %v650, %v845
        %v847 = vpop.f32.mrf.mxu0
        %848 = vmatprep.mubr.f32.mxu0 0.0
        %849 = vmatmul.mubr.f32.gmra.mxu0 %v675
        %v850 = vpop.f32.mrf.mxu0
        %v851 = vadd.f32 %v650, %v850
        %v852 = vpop.f32.mrf.mxu0
        %853 = vmatprep.mubr.f32.mxu0 0.0
        %854 = vmatmul.mubr.f32.gmra.mxu0 %v678
        %v855 = vpop.f32.mrf.mxu0
        %v856 = vadd.f32 %v650, %v855
        %v857 = vpop.f32.mrf.mxu0
        %858 = vmatprep.mubr.f32.mxu0 0.0
        %859 = vmatmul.mubr.f32.gmra.mxu0 %v681
        %v860 = vpop.f32.mrf.mxu0
        %v861 = vadd.f32 %v650, %v860
        %v862 = vpop.f32.mrf.mxu0
        %863 = vmatprep.mubr.f32.mxu0 0.0
        %864 = vmatmul.mubr.f32.gmra.mxu0 %v684
        %v865 = vpop.f32.mrf.mxu0
        %v866 = vadd.f32 %v650, %v865
        %v867 = vpop.f32.mrf.mxu0
        %868 = vmatprep.mubr.f32.mxu0 0.0
        %869 = vmatmul.mubr.f32.gmra.mxu0 %v687
        %v870 = vpop.f32.mrf.mxu0
        %v871 = vadd.f32 %v650, %v870
        %v872 = vpop.f32.mrf.mxu0
        %873 = vmatprep.mubr.f32.mxu0 0.0
        %874 = vmatmul.mubr.f32.gmra.mxu0 %v690
        %v875 = vpop.f32.mrf.mxu0
        %v876 = vadd.f32 %v650, %v875
        %v877 = vpop.f32.mrf.mxu0
        %878 = vmatprep.mubr.f32.mxu0 0.0
        %879 = vmatmul.mubr.f32.gmra.mxu0 %v693
        %v880 = vpop.f32.mrf.mxu0
        %v881 = vadd.f32 %v650, %v880
        %v882 = vpop.f32.mrf.mxu0
        %883 = vmatprep.mubr.f32.mxu0 0.0
        %884 = vmatmul.mubr.f32.gmra.mxu0 %v696
        %v885 = vpop.f32.mrf.mxu0
        %v886 = vadd.f32 %v650, %v885
        %v887 = vpop.f32.mrf.mxu0
        %888 = vmatprep.mubr.f32.mxu0 0.0
        %889 = vmatmul.mubr.f32.gmra.mxu0 %v699
        %v890 = vpop.f32.mrf.mxu0
        %v891 = vadd.f32 %v650, %v890
        %v892 = vpop.f32.mrf.mxu0
        %893 = vmatprep.mubr.f32.mxu0 0.0
        %894 = vmatmul.mubr.f32.gmra.mxu0 %v702
        %v895 = vpop.f32.mrf.mxu0
        %v896 = vadd.f32 %v650, %v895
        %v897 = vpop.f32.mrf.mxu0
        %898 = vmatprep.mubr.f32.mxu0 0.0
        %899 = vmatmul.mubr.f32.gmra.mxu0 %v705
        %v900 = vpop.f32.mrf.mxu0
        %v901 = vadd.f32 %v650, %v900
        %v902 = vpop.f32.mrf.mxu0
        %903 = vmatprep.mubr.f32.mxu0 0.0
        %904 = vmatmul.mubr.f32.gmra.mxu0 %v708
        %v905 = vpop.f32.mrf.mxu0
        %v906 = vadd.f32 %v650, %v905
        %v907 = vpop.f32.mrf.mxu0
        %908 = vmatprep.mubr.f32.mxu0 0.0
        %909 = vmatmul.mubr.f32.gmra.mxu0 %v711
        %v910 = vpop.f32.mrf.mxu0
        %v911 = vadd.f32 %v650, %v910
        %v912 = vpop.f32.mrf.mxu0
        %913 = vmatprep.mubr.f32.mxu0 0.0
        %914 = vmatmul.mubr.f32.gmra.mxu0 %v714
        %v915 = vpop.f32.mrf.mxu0
        %v916 = vadd.f32 %v650, %v915
        %v917 = vpop.f32.mrf.mxu0
        %918 = vmatprep.mubr.f32.mxu0 0.0
        %919 = vmatmul.mubr.f32.gmra.mxu0 %v717
        %v920 = vpop.f32.mrf.mxu0
        %v921 = vadd.f32 %v650, %v920
        %v922 = vpop.f32.mrf.mxu0
        %923 = vmatprep.mubr.f32.mxu0 0.0
        %924 = vmatmul.mubr.f32.gmra.mxu0 %v720
        %v925 = vpop.f32.mrf.mxu0
        %v926 = vadd.f32 %v650, %v925
        %v927 = vpop.f32.mrf.mxu0
        %928 = vmatprep.mubr.f32.mxu0 0.0
        %929 = vmatmul.mubr.f32.gmra.mxu0 %v723
        %v930 = vpop.f32.mrf.mxu0
        %v931 = vadd.f32 %v650, %v930
        %v932 = vpop.f32.mrf.mxu0
        %933 = vmatprep.mubr.f32.mxu0 0.0
        %934 = vmatmul.mubr.f32.gmra.mxu0 %v726
        %v935 = vpop.f32.mrf.mxu0
        %v936 = vadd.f32 %v650, %v935
        %v937 = vpop.f32.mrf.mxu0
        %938 = vmatprep.mubr.f32.mxu0 0.0
        %939 = vmatmul.mubr.f32.gmra.mxu0 %v729
        %v940 = vpop.f32.mrf.mxu0
        %v941 = vadd.f32 %v650, %v940
        %v942 = vpop.f32.mrf.mxu0
        %943 = vmatprep.mubr.f32.mxu0 0.0
        %944 = vmatmul.mubr.f32.gmra.mxu0 %v732
        %v945 = vpop.f32.mrf.mxu0
        %v946 = vadd.f32 %v650, %v945
        %v947 = vpop.f32.mrf.mxu0
        %948 = vmatprep.mubr.f32.mxu0 0.0
        %949 = vmatmul.mubr.f32.gmra.mxu0 %v735
        %v950 = vpop.f32.mrf.mxu0
        %v951 = vadd.f32 %v650, %v950
        %v952 = vpop.f32.mrf.mxu0
        %953 = vmatprep.mubr.f32.mxu0 0.0
        %954 = vmatmul.mubr.f32.gmra.mxu0 %v738
        %v955 = vpop.f32.mrf.mxu0
        %v956 = vadd.f32 %v650, %v955
        %v957 = vpop.f32.mrf.mxu0
        %958 = vmatprep.mubr.f32.mxu0 0.0
        %959 = vmatmul.mubr.f32.gmra.mxu0 %v741
        %v960 = vpop.f32.mrf.mxu0
        %v961 = vadd.f32 %v650, %v960
        %v962 = vpop.f32.mrf.mxu0
        %963 = vmatprep.mubr.f32.mxu0 0.0
        %964 = vmatmul.mubr.f32.gmra.mxu0 %v744
        %v965 = vpop.f32.mrf.mxu0
        %v966 = vadd.f32 %v650, %v965
        %v967 = vpop.f32.mrf.mxu0
        %968 = vmatprep.mubr.f32.mxu0 0.0
        %969 = vmatmul.mubr.f32.gmra.mxu0 %v747
        %v970 = vpop.f32.mrf.mxu0
        %v971 = vadd.f32 %v650, %v970
        %v972 = vpop.f32.mrf.mxu0
        %973 = vdwg.mxu0
        %vm974 = vcmask 72704
        %975 = vst.msk [vmem:[%s226] sm:$0xff] %vm974, %v816
        %976 = vst.msk [vmem:[%s226 + $0x8] sm:$0xff] %vm974, %v821
        %977 = vst.msk [vmem:[%s226 + $0x10] sm:$0xff] %vm974, %v826
        %978 = vst.msk [vmem:[%s226 + $0x18] sm:$0xff] %vm974, %v831
        %979 = vst.msk [vmem:[%s226 + $0x20] sm:$0xff] %vm974, %v836
        %980 = vst.msk [vmem:[%s226 + $0x28] sm:$0xff] %vm974, %v841
        %981 = vst.msk [vmem:[%s226 + $0x30] sm:$0xff] %vm974, %v846
        %982 = vst.msk [vmem:[%s226 + $0x38] sm:$0xff] %vm974, %v851
        %983 = vst.msk [vmem:[%s226 + $0x40] sm:$0xff] %vm974, %v856
        %984 = vst.msk [vmem:[%s226 + $0x48] sm:$0xff] %vm974, %v861
        %985 = vst.msk [vmem:[%s226 + $0x50] sm:$0xff] %vm974, %v866
        %986 = vst.msk [vmem:[%s226 + $0x58] sm:$0xff] %vm974, %v871
        %987 = vst.msk [vmem:[%s226 + $0x60] sm:$0xff] %vm974, %v876
        %988 = vst.msk [vmem:[%s226 + $0x68] sm:$0xff] %vm974, %v881
        %989 = vst.msk [vmem:[%s226 + $0x70] sm:$0xff] %vm974, %v886
        %990 = vst.msk [vmem:[%s226 + $0x78] sm:$0xff] %vm974, %v891
        %991 = vst.msk [vmem:[%s226 + $0x80] sm:$0xff] %vm974, %v896
        %992 = vst.msk [vmem:[%s226 + $0x88] sm:$0xff] %vm974, %v901
        %993 = vst.msk [vmem:[%s226 + $0x90] sm:$0xff] %vm974, %v906
        %994 = vst.msk [vmem:[%s226 + $0x98] sm:$0xff] %vm974, %v911
        %995 = vst.msk [vmem:[%s226 + $0xa0] sm:$0xff] %vm974, %v916
        %996 = vst.msk [vmem:[%s226 + $0xa8] sm:$0xff] %vm974, %v921
        %997 = vst.msk [vmem:[%s226 + $0xb0] sm:$0xff] %vm974, %v926
        %998 = vst.msk [vmem:[%s226 + $0xb8] sm:$0xff] %vm974, %v931
        %999 = vst.msk [vmem:[%s226 + $0xc0] sm:$0xff] %vm974, %v936
        %1000 = vst.msk [vmem:[%s226 + $0xc8] sm:$0xff] %vm974, %v941
        %1001 = vst.msk [vmem:[%s226 + $0xd0] sm:$0xff] %vm974, %v946
        %1002 = vst.msk [vmem:[%s226 + $0xd8] sm:$0xff] %vm974, %v951
        %1003 = vst.msk [vmem:[%s226 + $0xe0] sm:$0xff] %vm974, %v956
        %1004 = vst.msk [vmem:[%s226 + $0xe8] sm:$0xff] %vm974, %v961
        %1005 = vst.msk [vmem:[%s226 + $0xf0] sm:$0xff] %vm974, %v966
        %1006 = vst.msk [vmem:[%s226 + $0xf8] sm:$0xff] %vm974, %v971
        %s1007 = sand.u32 %s134, 1
        %s1008 = sand.u32 %s134, 1
        %s1009 = smul.addr %s1008, 256
        %s1010 = scalar_lea.vmem [#allocation2], %s1009
        // Predicated region
        $region41: #{node_width_predictor.1} parent=39 // pred_check
          %p1011 = pneg %p144
        $region42: #{node_width_predictor.1} parent=39 // pred_check_branch
          %1013 = sbr.rel (%p1011) target = $region44
        $region43: #{node_width_predictor.1} parent=39 // pred_region
          %s1014 = smul.u32 32, %s16
          %s1015 = ssub.s32 38, %s1014
          %p1016 = scmp.lt.s32.totalorder %s1015, 32
          %s1017 = scalar_select %p1016, %s1015, 32
          %s1018 = smul.u32 128, %s1017
          %p1019 = scmp.ne.s32.totalorder 0, %s1018
          %s1020 = smul.addr %s1014, 8
          %s1021 = scalar_lea.vmem %s5, %s1020
          // Predicated region
          $region45: #{node_width_predictor.1} parent=43 // pred_check
            %p1022 = pneg %p1019
          $region46: #{node_width_predictor.1} parent=43 // pred_check_branch
            %1024 = sbr.rel (%p1022) target = $region48
          $region47: #{node_width_predictor.1} parent=43 // pred_region
            // Predicated region
            $region49: #{node_width_predictor.1} parent=47 // pred_check
              _
            $region50: #{node_width_predictor.1} parent=47 // pred_check_branch
              %1026 = sbr.rel (0) target = $region52
            $region51: #{node_width_predictor.1} parent=47 // pred_region
              // Predicated region
              $region71: #{node_width_predictor.1} parent=51 // pred_check
                _
              $region72: #{node_width_predictor.1} parent=51 // pred_check_branch
                %1138 = sbr.rel (0) target = $region74
              $region73: #{node_width_predictor.1} parent=51 // pred_region
                %s1139 = sshrl.u32 %s1017, 5
                // While loop
                $region75: #{node_width_predictor.1} parent=73 // loop_pre_header
                  _
                $region76: #{node_width_predictor.1} parent=73 // loop_header
                  %s1141 = sphi 0, %s1143
                  %p1142 = scmp.ge.s32.totalorder %s1141, %s1139
                  %s1146 = sphi 0, %s1215
                  %s1147 = sphi %s1010, %s1218
                  %s1148 = sphi %s1021, %s1219
                $region77: #{node_width_predictor.1} parent=73 // loop_header_branch
                  %1145 = sbr.rel (%p1142) target = $region81
                $region78: #{node_width_predictor.1} parent=73 // loop_body
                  %v1149 = vld [vmem:[%s1147] sm:$0xff]
                  %1150 = vst [vmem:[%s1148] sm:$0xff] %v1149
                  %v1151 = vld [vmem:[%s1147 + $0x8] sm:$0xff]
                  %1152 = vst [vmem:[%s1148 + $0x8] sm:$0xff] %v1151
                  %v1153 = vld [vmem:[%s1147 + $0x10] sm:$0xff]
                  %1154 = vst [vmem:[%s1148 + $0x10] sm:$0xff] %v1153
                  %v1155 = vld [vmem:[%s1147 + $0x18] sm:$0xff]
                  %1156 = vst [vmem:[%s1148 + $0x18] sm:$0xff] %v1155
                  %v1157 = vld [vmem:[%s1147 + $0x20] sm:$0xff]
                  %1158 = vst [vmem:[%s1148 + $0x20] sm:$0xff] %v1157
                  %v1159 = vld [vmem:[%s1147 + $0x28] sm:$0xff]
                  %1160 = vst [vmem:[%s1148 + $0x28] sm:$0xff] %v1159
                  %v1161 = vld [vmem:[%s1147 + $0x30] sm:$0xff]
                  %1162 = vst [vmem:[%s1148 + $0x30] sm:$0xff] %v1161
                  %v1163 = vld [vmem:[%s1147 + $0x38] sm:$0xff]
                  %1164 = vst [vmem:[%s1148 + $0x38] sm:$0xff] %v1163
                  %v1165 = vld [vmem:[%s1147 + $0x40] sm:$0xff]
                  %1166 = vst [vmem:[%s1148 + $0x40] sm:$0xff] %v1165
                  %v1167 = vld [vmem:[%s1147 + $0x48] sm:$0xff]
                  %1168 = vst [vmem:[%s1148 + $0x48] sm:$0xff] %v1167
                  %v1169 = vld [vmem:[%s1147 + $0x50] sm:$0xff]
                  %1170 = vst [vmem:[%s1148 + $0x50] sm:$0xff] %v1169
                  %v1171 = vld [vmem:[%s1147 + $0x58] sm:$0xff]
                  %1172 = vst [vmem:[%s1148 + $0x58] sm:$0xff] %v1171
                  %v1173 = vld [vmem:[%s1147 + $0x60] sm:$0xff]
                  %1174 = vst [vmem:[%s1148 + $0x60] sm:$0xff] %v1173
                  %v1175 = vld [vmem:[%s1147 + $0x68] sm:$0xff]
                  %1176 = vst [vmem:[%s1148 + $0x68] sm:$0xff] %v1175
                  %v1177 = vld [vmem:[%s1147 + $0x70] sm:$0xff]
                  %1178 = vst [vmem:[%s1148 + $0x70] sm:$0xff] %v1177
                  %v1179 = vld [vmem:[%s1147 + $0x78] sm:$0xff]
                  %1180 = vst [vmem:[%s1148 + $0x78] sm:$0xff] %v1179
                  %v1181 = vld [vmem:[%s1147 + $0x80] sm:$0xff]
                  %1182 = vst [vmem:[%s1148 + $0x80] sm:$0xff] %v1181
                  %v1183 = vld [vmem:[%s1147 + $0x88] sm:$0xff]
                  %1184 = vst [vmem:[%s1148 + $0x88] sm:$0xff] %v1183
                  %v1185 = vld [vmem:[%s1147 + $0x90] sm:$0xff]
                  %1186 = vst [vmem:[%s1148 + $0x90] sm:$0xff] %v1185
                  %v1187 = vld [vmem:[%s1147 + $0x98] sm:$0xff]
                  %1188 = vst [vmem:[%s1148 + $0x98] sm:$0xff] %v1187
                  %v1189 = vld [vmem:[%s1147 + $0xa0] sm:$0xff]
                  %1190 = vst [vmem:[%s1148 + $0xa0] sm:$0xff] %v1189
                  %v1191 = vld [vmem:[%s1147 + $0xa8] sm:$0xff]
                  %1192 = vst [vmem:[%s1148 + $0xa8] sm:$0xff] %v1191
                  %v1193 = vld [vmem:[%s1147 + $0xb0] sm:$0xff]
                  %1194 = vst [vmem:[%s1148 + $0xb0] sm:$0xff] %v1193
                  %v1195 = vld [vmem:[%s1147 + $0xb8] sm:$0xff]
                  %1196 = vst [vmem:[%s1148 + $0xb8] sm:$0xff] %v1195
                  %v1197 = vld [vmem:[%s1147 + $0xc0] sm:$0xff]
                  %1198 = vst [vmem:[%s1148 + $0xc0] sm:$0xff] %v1197
                  %v1199 = vld [vmem:[%s1147 + $0xc8] sm:$0xff]
                  %1200 = vst [vmem:[%s1148 + $0xc8] sm:$0xff] %v1199
                  %v1201 = vld [vmem:[%s1147 + $0xd0] sm:$0xff]
                  %1202 = vst [vmem:[%s1148 + $0xd0] sm:$0xff] %v1201
                  %v1203 = vld [vmem:[%s1147 + $0xd8] sm:$0xff]
                  %1204 = vst [vmem:[%s1148 + $0xd8] sm:$0xff] %v1203
                  %v1205 = vld [vmem:[%s1147 + $0xe0] sm:$0xff]
                  %1206 = vst [vmem:[%s1148 + $0xe0] sm:$0xff] %v1205
                  %v1207 = vld [vmem:[%s1147 + $0xe8] sm:$0xff]
                  %1208 = vst [vmem:[%s1148 + $0xe8] sm:$0xff] %v1207
                  %v1209 = vld [vmem:[%s1147 + $0xf0] sm:$0xff]
                  %1210 = vst [vmem:[%s1148 + $0xf0] sm:$0xff] %v1209
                  %v1211 = vld [vmem:[%s1147 + $0xf8] sm:$0xff]
                  %1212 = vst [vmem:[%s1148 + $0xf8] sm:$0xff] %v1211
                  %s1213 = sadd.s32 1, %s1146
                  %p1214 = scmp.ge.s32.totalorder %s1213, %s1139
                  %s1215 = scalar_select %p1214, 0, %s1213
                  %s1216 = smul.u32 %s1215, 256
                  %s1217 = smul.u32 %s1215, 256
                  %s1218 = scalar_lea.vmem %s1010, %s1216 [#allocation2]
                  %s1219 = scalar_lea.vmem %s1021, %s1217
                $region79: #{node_width_predictor.1} parent=73 // loop_footer
                  %s1143 = sadd.s32 %s1141, 1
                $region80: #{node_width_predictor.1} parent=73 // loop_footer_branch
                  %1140 = sbr.rel target = $region76
                $region81: #{node_width_predictor.1} parent=73 // loop_exit
                  _
                %s1220 = sshrl.u32 %s1017, 5
                %s1221 = sand.u32 %s1017, 31
                %s1222 = smul.u32 %s1220, 32
                %s1223 = smul.u32 8, %s1222
                %s1224 = scalar_lea.vmem %s1010, %s1223 [#allocation2]
                %s1225 = smul.u32 8, %s1222
                %s1226 = scalar_lea.vmem %s1021, %s1225
                // While loop
                $region82: #{node_width_predictor.1} parent=73 // loop_pre_header
                  _
                $region83: #{node_width_predictor.1} parent=73 // loop_header
                  %s1228 = sphi 0, %s1230
                  %p1229 = scmp.ge.s32.totalorder %s1228, %s1221
                  %s1233 = sphi 0, %s1240
                  %s1234 = sphi %s1224, %s1243
                  %s1235 = sphi %s1226, %s1244
                $region84: #{node_width_predictor.1} parent=73 // loop_header_branch
                  %1232 = sbr.rel (%p1229) target = $region88
                $region85: #{node_width_predictor.1} parent=73 // loop_body
                  %v1236 = vld [vmem:[%s1234] sm:$0xff]
                  %1237 = vst [vmem:[%s1235] sm:$0xff] %v1236
                  %s1238 = sadd.s32 1, %s1233
                  %p1239 = scmp.ge.s32.totalorder %s1238, %s1221
                  %s1240 = scalar_select %p1239, 0, %s1238
                  %s1241 = smul.u32 %s1240, 8
                  %s1242 = smul.u32 %s1240, 8
                  %s1243 = scalar_lea.vmem %s1224, %s1241 [#allocation2]
                  %s1244 = scalar_lea.vmem %s1226, %s1242
                $region86: #{node_width_predictor.1} parent=73 // loop_footer
                  %s1230 = sadd.s32 %s1228, 1
                $region87: #{node_width_predictor.1} parent=73 // loop_footer_branch
                  %1227 = sbr.rel target = $region83
                $region88: #{node_width_predictor.1} parent=73 // loop_exit
                  _
              $region74: #{node_width_predictor.1} parent=51 // pred_fallthru
                _
              // Predicated region
              $region89: #{node_width_predictor.1} parent=51 // pred_check
                _
              $region90: #{node_width_predictor.1} parent=51 // pred_check_branch
                %1246 = sbr.rel target = $region92
              $region91: #{node_width_predictor.1} parent=51 // pred_region
                _
              $region92: #{node_width_predictor.1} parent=51 // pred_fallthru
                _
            $region52: #{node_width_predictor.1} parent=47 // pred_fallthru
              _
            // Predicated region
            $region53: #{node_width_predictor.1} parent=47 // pred_check
              _
            $region54: #{node_width_predictor.1} parent=47 // pred_check_branch
              %1028 = sbr.rel target = $region56
            $region55: #{node_width_predictor.1} parent=47 // pred_region
              %s1030 = ssub.s32 256, 1
              %s1031 = sshrl.u32 %s1017, 5
              // While loop
              $region57: #{node_width_predictor.1} parent=55 // loop_pre_header
                _
              $region58: #{node_width_predictor.1} parent=55 // loop_header
                %s1033 = sphi 0, %s1035
                %p1034 = scmp.ge.s32.totalorder %s1033, %s1031
                %s1038 = sphi 0, %s1107
                %s1039 = sphi %s1010, %s1110
                %s1040 = sphi %s1021, %s1111
              $region59: #{node_width_predictor.1} parent=55 // loop_header_branch
                %1037 = sbr.rel (%p1034) target = $region63
              $region60: #{node_width_predictor.1} parent=55 // loop_body
                %v1041 = vld [vmem:[%s1039] sm:%s1030]
                %1042 = vst [vmem:[%s1040] sm:%s1030] %v1041
                %v1043 = vld [vmem:[%s1039 + $0x8] sm:%s1030]
                %1044 = vst [vmem:[%s1040 + $0x8] sm:%s1030] %v1043
                %v1045 = vld [vmem:[%s1039 + $0x10] sm:%s1030]
                %1046 = vst [vmem:[%s1040 + $0x10] sm:%s1030] %v1045
                %v1047 = vld [vmem:[%s1039 + $0x18] sm:%s1030]
                %1048 = vst [vmem:[%s1040 + $0x18] sm:%s1030] %v1047
                %v1049 = vld [vmem:[%s1039 + $0x20] sm:%s1030]
                %1050 = vst [vmem:[%s1040 + $0x20] sm:%s1030] %v1049
                %v1051 = vld [vmem:[%s1039 + $0x28] sm:%s1030]
                %1052 = vst [vmem:[%s1040 + $0x28] sm:%s1030] %v1051
                %v1053 = vld [vmem:[%s1039 + $0x30] sm:%s1030]
                %1054 = vst [vmem:[%s1040 + $0x30] sm:%s1030] %v1053
                %v1055 = vld [vmem:[%s1039 + $0x38] sm:%s1030]
                %1056 = vst [vmem:[%s1040 + $0x38] sm:%s1030] %v1055
                %v1057 = vld [vmem:[%s1039 + $0x40] sm:%s1030]
                %1058 = vst [vmem:[%s1040 + $0x40] sm:%s1030] %v1057
                %v1059 = vld [vmem:[%s1039 + $0x48] sm:%s1030]
                %1060 = vst [vmem:[%s1040 + $0x48] sm:%s1030] %v1059
                %v1061 = vld [vmem:[%s1039 + $0x50] sm:%s1030]
                %1062 = vst [vmem:[%s1040 + $0x50] sm:%s1030] %v1061
                %v1063 = vld [vmem:[%s1039 + $0x58] sm:%s1030]
                %1064 = vst [vmem:[%s1040 + $0x58] sm:%s1030] %v1063
                %v1065 = vld [vmem:[%s1039 + $0x60] sm:%s1030]
                %1066 = vst [vmem:[%s1040 + $0x60] sm:%s1030] %v1065
                %v1067 = vld [vmem:[%s1039 + $0x68] sm:%s1030]
                %1068 = vst [vmem:[%s1040 + $0x68] sm:%s1030] %v1067
                %v1069 = vld [vmem:[%s1039 + $0x70] sm:%s1030]
                %1070 = vst [vmem:[%s1040 + $0x70] sm:%s1030] %v1069
                %v1071 = vld [vmem:[%s1039 + $0x78] sm:%s1030]
                %1072 = vst [vmem:[%s1040 + $0x78] sm:%s1030] %v1071
                %v1073 = vld [vmem:[%s1039 + $0x80] sm:%s1030]
                %1074 = vst [vmem:[%s1040 + $0x80] sm:%s1030] %v1073
                %v1075 = vld [vmem:[%s1039 + $0x88] sm:%s1030]
                %1076 = vst [vmem:[%s1040 + $0x88] sm:%s1030] %v1075
                %v1077 = vld [vmem:[%s1039 + $0x90] sm:%s1030]
                %1078 = vst [vmem:[%s1040 + $0x90] sm:%s1030] %v1077
                %v1079 = vld [vmem:[%s1039 + $0x98] sm:%s1030]
                %1080 = vst [vmem:[%s1040 + $0x98] sm:%s1030] %v1079
                %v1081 = vld [vmem:[%s1039 + $0xa0] sm:%s1030]
                %1082 = vst [vmem:[%s1040 + $0xa0] sm:%s1030] %v1081
                %v1083 = vld [vmem:[%s1039 + $0xa8] sm:%s1030]
                %1084 = vst [vmem:[%s1040 + $0xa8] sm:%s1030] %v1083
                %v1085 = vld [vmem:[%s1039 + $0xb0] sm:%s1030]
                %1086 = vst [vmem:[%s1040 + $0xb0] sm:%s1030] %v1085
                %v1087 = vld [vmem:[%s1039 + $0xb8] sm:%s1030]
                %1088 = vst [vmem:[%s1040 + $0xb8] sm:%s1030] %v1087
                %v1089 = vld [vmem:[%s1039 + $0xc0] sm:%s1030]
                %1090 = vst [vmem:[%s1040 + $0xc0] sm:%s1030] %v1089
                %v1091 = vld [vmem:[%s1039 + $0xc8] sm:%s1030]
                %1092 = vst [vmem:[%s1040 + $0xc8] sm:%s1030] %v1091
                %v1093 = vld [vmem:[%s1039 + $0xd0] sm:%s1030]
                %1094 = vst [vmem:[%s1040 + $0xd0] sm:%s1030] %v1093
                %v1095 = vld [vmem:[%s1039 + $0xd8] sm:%s1030]
                %1096 = vst [vmem:[%s1040 + $0xd8] sm:%s1030] %v1095
                %v1097 = vld [vmem:[%s1039 + $0xe0] sm:%s1030]
                %1098 = vst [vmem:[%s1040 + $0xe0] sm:%s1030] %v1097
                %v1099 = vld [vmem:[%s1039 + $0xe8] sm:%s1030]
                %1100 = vst [vmem:[%s1040 + $0xe8] sm:%s1030] %v1099
                %v1101 = vld [vmem:[%s1039 + $0xf0] sm:%s1030]
                %1102 = vst [vmem:[%s1040 + $0xf0] sm:%s1030] %v1101
                %v1103 = vld [vmem:[%s1039 + $0xf8] sm:%s1030]
                %1104 = vst [vmem:[%s1040 + $0xf8] sm:%s1030] %v1103
                %s1105 = sadd.s32 1, %s1038
                %p1106 = scmp.ge.s32.totalorder %s1105, %s1031
                %s1107 = scalar_select %p1106, 0, %s1105
                %s1108 = smul.u32 %s1107, 256
                %s1109 = smul.u32 %s1107, 256
                %s1110 = scalar_lea.vmem %s1010, %s1108 [#allocation2]
                %s1111 = scalar_lea.vmem %s1021, %s1109
              $region61: #{node_width_predictor.1} parent=55 // loop_footer
                %s1035 = sadd.s32 %s1033, 1
              $region62: #{node_width_predictor.1} parent=55 // loop_footer_branch
                %1032 = sbr.rel target = $region58
              $region63: #{node_width_predictor.1} parent=55 // loop_exit
                _
              %s1112 = sshrl.u32 %s1017, 5
              %s1113 = sand.u32 %s1017, 31
              %s1114 = smul.u32 %s1112, 32
              %s1115 = smul.u32 8, %s1114
              %s1116 = scalar_lea.vmem %s1010, %s1115 [#allocation2]
              %s1117 = smul.u32 8, %s1114
              %s1118 = scalar_lea.vmem %s1021, %s1117
              // While loop
              $region64: #{node_width_predictor.1} parent=55 // loop_pre_header
                _
              $region65: #{node_width_predictor.1} parent=55 // loop_header
                %s1120 = sphi 0, %s1122
                %p1121 = scmp.ge.s32.totalorder %s1120, %s1113
                %s1125 = sphi 0, %s1132
                %s1126 = sphi %s1116, %s1135
                %s1127 = sphi %s1118, %s1136
              $region66: #{node_width_predictor.1} parent=55 // loop_header_branch
                %1124 = sbr.rel (%p1121) target = $region70
              $region67: #{node_width_predictor.1} parent=55 // loop_body
                %v1128 = vld [vmem:[%s1126] sm:%s1030]
                %1129 = vst [vmem:[%s1127] sm:%s1030] %v1128
                %s1130 = sadd.s32 1, %s1125
                %p1131 = scmp.ge.s32.totalorder %s1130, %s1113
                %s1132 = scalar_select %p1131, 0, %s1130
                %s1133 = smul.u32 %s1132, 8
                %s1134 = smul.u32 %s1132, 8
                %s1135 = scalar_lea.vmem %s1116, %s1133 [#allocation2]
                %s1136 = scalar_lea.vmem %s1118, %s1134
              $region68: #{node_width_predictor.1} parent=55 // loop_footer
                %s1122 = sadd.s32 %s1120, 1
              $region69: #{node_width_predictor.1} parent=55 // loop_footer_branch
                %1119 = sbr.rel target = $region65
              $region70: #{node_width_predictor.1} parent=55 // loop_exit
                _
            $region56: #{node_width_predictor.1} parent=47 // pred_fallthru
              _
          $region48: #{node_width_predictor.1} parent=43 // pred_fallthru
            _
          %1247 = vnop
        $region44: #{node_width_predictor.1} parent=39 // pred_fallthru
          _
      $region40: #{node_width_predictor.1} parent=5 // pred_fallthru
        _
      %p1248 = scmp.le.s32.totalorder 2, %s11
      // Predicated region
      $region93: #{node_width_predictor.1} parent=5 // pred_check
        %p1249 = pneg %p1248
      $region94: #{node_width_predictor.1} parent=5 // pred_check_branch
        %1251 = sbr.rel (%p1249) target = $region96
      $region95: #{node_width_predictor.1} parent=5 // pred_region
        %s1252 = ssub.s32 %s11, 2
        // Predicated region
        $region97: #{node_width_predictor.1} parent=95 // pred_check
          %p1253 = pneg %p150
        $region98: #{node_width_predictor.1} parent=95 // pred_check_branch
          %1255 = sbr.rel (%p1253) target = $region100
        $region99: #{node_width_predictor.1} parent=95 // pred_region
          %s1256 = sand.u32 %s135, 1
          %s1257 = sand.u32 %s135, 1
          %s1258 = smul.addr %s1257, 256
          %s1259 = scalar_lea.vmem [#allocation2], %s1258
        $region100: #{node_width_predictor.1} parent=95 // pred_fallthru
          _
      $region96: #{node_width_predictor.1} parent=5 // pred_fallthru
        _
    $region6: #{node_width_predictor.1} parent=1 // loop_footer
      %s15 = sadd.s32 1, %s11
    $region7: #{node_width_predictor.1} parent=1 // loop_footer_branch
      %10 = sbr.rel target = $region3
    $region8: #{node_width_predictor.1} parent=1 // loop_exit
      _

</llo_original>
